<compile_context>
chip_gen: v6e
topology: v6e:2x2x1
jax: 0.10.0
libtpu: 0.0.40
codegen_flags: <defaults>
</compile_context>

<pallas_src>
import numpy as np
import jax
import jax.numpy as jnp
from jax.experimental import pallas as pl
from jax.experimental.pallas import tpu as pltpu


_LANE = 128
_SUBLANE = 8


def _round_up(x, m):
    return ((x + m - 1) // m) * m


def _round_down(x, m):
    return (x // m) * m


def _vmem_budgets(vmem_budget_bytes, vmem_limit_bytes):
    """Pick a per-generation double-buffered footprint budget + scoped limit."""
    if vmem_budget_bytes is None:
        try:
            vmem = int(pltpu.get_tpu_info().vmem_capacity_bytes)
        except Exception:
            vmem = 64 << 20                       # conservative (v7x physical)
        vmem_budget_bytes = max(8 << 20, vmem // 4)   # v7x: 16 MiB, v5e/v6e: 32 MiB
    if vmem_limit_bytes is None:
        vmem_limit_bytes = max(32 << 20, 2 * vmem_budget_bytes)
    return int(vmem_budget_bytes), int(vmem_limit_bytes)


def _one_hot_nd_kernel(x_ref, o_ref):
    # x_ref: (bn, 1, t) int32 labels; o_ref: (bn, td, t) f32 one-hot slab.
    # Compute is iota+compare+cast — free under the output store DMA.
    labels = x_ref[...]
    bn, td, t = o_ref.shape
    d0 = pl.program_id(1) * td                                   # depth-block offset
    cls = d0 + jax.lax.broadcasted_iota(jnp.int32, (bn, td, t), 1)
    o_ref[...] = (labels == cls).astype(o_ref.dtype)


def _one_hot_1d_kernel(x_ref, o_ref):
    # x_ref: (tm, 1) int32 labels; o_ref: (tm, td) f32 one-hot rows.
    # Note: depth < 128 makes the output lane dim sub-128 (masked vst stores);
    # we batch many rows per step so the masked-store cost is amortised.
    labels = x_ref[...]
    tm, td = o_ref.shape
    d0 = pl.program_id(1) * td
    cls = d0 + jax.lax.broadcasted_iota(jnp.int32, (tm, td), 1)
    o_ref[...] = (labels == cls).astype(o_ref.dtype)


def one_hot_pallas(x_in, depth, tile=None,
                   vmem_budget_bytes=None, vmem_limit_bytes=None):
    """Pallas equivalent of One_Hot(depth).forward(x_in).

    tile: optional explicit lane tile (multiple of 128). Default: as large as
          the per-generation VMEM budget allows (whole row if it fits).
    """
    depth = int(depth)
    s = tuple(int(d) for d in x_in.shape)
    n_dim = len(s)
    budget, limit = _vmem_budgets(vmem_budget_bytes, vmem_limit_bytes)

    if n_dim == 0:
        out = one_hot_pallas(jnp.reshape(x_in, (1,)), depth, tile, budget, limit)
        return jnp.reshape(out, (depth,))

    # ------------------------------------------------------------------ 1-D --
    if n_dim == 1:
        # PyTorch returns (M, depth): labels on sublanes, classes on lanes.
        # TODO(synk): for tiny depth with huge M a lane-dense (depth, M) layout
        #             would store faster, but it changes the caller-visible layout.
        m = s[0]
        flat = jnp.reshape(x_in, (m, 1)).astype(jnp.int32)

        # Depth blocking only for enormous class counts; the depth tile is the
        # output's lane dim, so when blocked it must be a multiple of 128.
        max_td = max(_LANE, _round_down(budget // (2 * 4 * _SUBLANE) - _LANE, _LANE))
        td = depth if depth <= max_td else max_td
        cap_tm = max(_SUBLANE, _round_down(budget // (2 * 4 * (td + 1)), _SUBLANE))
        tm = max(_SUBLANE, min(_round_up(m, _SUBLANE), cap_tm, 32768))

        grid = (pl.cdiv(m, tm), pl.cdiv(depth, td))
        # v7x has 2 TensorCores: give a parallel axis >= 2 steps when possible.
        if grid[0] * grid[1] == 1 and m >= 2 * _SUBLANE:
            tm = max(_SUBLANE, _round_up((m + 1) // 2, _SUBLANE))
            grid = (pl.cdiv(m, tm), grid[1])

        out = pl.pallas_call(
            _one_hot_1d_kernel,
            out_shape=jax.ShapeDtypeStruct((m, depth), jnp.float32),
            grid=grid,
            in_specs=[pl.BlockSpec((tm, 1), lambda i, d: (i, 0))],
            out_specs=pl.BlockSpec((tm, td), lambda i, d: (i, d)),
            compiler_params=pltpu.CompilerParams(
                dimension_semantics=("parallel", "parallel"),
                vmem_limit_bytes=limit),
            cost_estimate=pl.CostEstimate(
                flops=m * depth, transcendentals=0,
                bytes_accessed=4 * m + 4 * m * depth),
        )(flat)
        return out

    # -------------------------------------------- n_dim > 1: (N, depth, rest) --
    s0 = s[0]
    r = int(np.prod(s[1:]))
    r_ceil = _round_up(max(r, 1), _LANE)

    # Depth tile (3rd grid axis). Bounded so that even a 128-lane block stays
    # well inside the budget (2 * 4B * (td+1) * 128 <= budget).
    max_td = max(_SUBLANE,
                 min(4096, _round_down(budget // (2 * 4 * _LANE) - 1, _SUBLANE)))
    td = depth if depth <= max_td else max_td

    # Lane tile: whole row if it fits the budget; honour `tile` only if passed.
    per_lane_bytes = 2 * 4 * (td + 1)        # double-buffered f32 out rows + i32 label row
    cap_t = max(_LANE, _round_down(budget // per_lane_bytes, _LANE))
    t = min(r_ceil, cap_t)
    if tile is not None:
        t = min(t, max(_LANE, _round_down(int(tile), _LANE)))
    t = max(_LANE, t)

    # Batch folding: grow the output block toward ~4 MiB so per-step overhead
    # amortises; never exceed the double-buffered VMEM budget.
    target_block_bytes = 4 << 20
    out_block_bytes_1 = 4 * td * t
    bn_budget = max(1, budget // (2 * 4 * t * (td + 1)))
    bn = max(1, min(s0, target_block_bytes // max(1, out_block_bytes_1), bn_budget))

    grid = (pl.cdiv(s0, bn), pl.cdiv(depth, td), pl.cdiv(r, t))

    # v7x has 2 TensorCores: a single-step grid idles one; split an axis.
    if grid[0] * grid[1] * grid[2] == 1:
        if s0 >= 2:
            bn = max(1, (s0 + 1) // 2)
        elif r >= 2 * _LANE:
            t = max(_LANE, _round_up((r + 1) // 2, _LANE))
        elif depth >= 2 * _SUBLANE:
            td = max(_SUBLANE, _round_up((depth + 1) // 2, _SUBLANE))
        grid = (pl.cdiv(s0, bn), pl.cdiv(depth, td), pl.cdiv(r, t))

    flat = jnp.reshape(x_in, (s0, 1, r)).astype(jnp.int32)

    out = pl.pallas_call(
        _one_hot_nd_kernel,
        out_shape=jax.ShapeDtypeStruct((s0, depth, r), jnp.float32),
        grid=grid,
        in_specs=[pl.BlockSpec((bn, 1, t), lambda b, d, i: (b, 0, i))],
        out_specs=pl.BlockSpec((bn, td, t), lambda b, d, i: (b, d, i)),
        compiler_params=pltpu.CompilerParams(
            dimension_semantics=("parallel", "parallel", "parallel"),
            vmem_limit_bytes=limit),
        cost_estimate=pl.CostEstimate(
            flops=s0 * depth * r, transcendentals=0,
            bytes_accessed=4 * s0 * r + 4 * s0 * depth * r),
    )(flat)

    # Final PyTorch layout: (S0, depth, S1, ..., S_{n-1}) with .squeeze(dim=2)
    # (dim 2 corresponds to S1). Pure metadata reshape of (S0, depth, r).
    rest = s[1:]
    if rest and rest[0] == 1:
        rest = rest[1:]
    return jnp.reshape(out, (s0, depth) + rest)


def _reference(x_in, depth):
    """Pure-JAX reference mirroring the PyTorch forward."""
    s = x_in.shape
    n_dim = len(s)
    oh = jax.nn.one_hot(x_in.astype(jnp.int32), depth, dtype=jnp.float32)  # s + (depth,)
    if n_dim > 1:
        perm = (0, n_dim) + tuple(range(1, n_dim))
        res = jnp.transpose(oh, perm)
        if res.shape[2] == 1:
            res = jnp.squeeze(res, axis=2)
        return res
    return oh


if __name__ == "__main__":
    key = jax.random.PRNGKey(0)

    # 1) Typical segmentation-label input: (N, 1, H, W) -> (N, depth, H, W).
    depth = 4
    x = jax.random.randint(key, (2, 1, 16, 16), minval=0, maxval=depth, dtype=jnp.int32)
    out = jax.block_until_ready(one_hot_pallas(x, depth))
    ref = _reference(x, depth)
    assert out.shape == (2, depth, 16, 16), out.shape
    assert out.dtype == jnp.float32
    np.testing.assert_allclose(np.asarray(out), np.asarray(ref), atol=0, rtol=0)

    # 2) Row length not a multiple of 128 (exercises boundary-clipped tiles,
    #    no host-side pad/slice anymore).
    k2 = jax.random.PRNGKey(1)
    x2 = jax.random.randint(k2, (3, 1, 10, 10), minval=0, maxval=depth, dtype=jnp.int32)
    out2 = jax.block_until_ready(one_hot_pallas(x2, depth))
    ref2 = _reference(x2, depth)
    assert out2.shape == (3, depth, 10, 10), out2.shape
    np.testing.assert_allclose(np.asarray(out2), np.asarray(ref2), atol=0, rtol=0)

    # 3) 1-D input -> (M, depth).
    k3 = jax.random.PRNGKey(2)
    x3 = jax.random.randint(k3, (37,), minval=0, maxval=5, dtype=jnp.int32)
    out3 = jax.block_until_ready(one_hot_pallas(x3, 5))
    ref3 = _reference(x3, 5)
    assert out3.shape == (37, 5), out3.shape
    np.testing.assert_allclose(np.asarray(out3), np.asarray(ref3), atol=0, rtol=0)

    # 4) Multi-channel second dim (no squeeze) + depth % 8 != 0.
    k4 = jax.random.PRNGKey(3)
    x4 = jax.random.randint(k4, (2, 4, 8, 8), minval=0, maxval=3, dtype=jnp.int32)
    out4 = jax.block_until_ready(one_hot_pallas(x4, 3))
    ref4 = _reference(x4, 3)
    assert out4.shape == (2, 3, 4, 8, 8), out4.shape
    np.testing.assert_allclose(np.asarray(out4), np.asarray(ref4), atol=0, rtol=0)

    # 5) Force the depth-blocked (3rd grid axis) path with a tiny VMEM budget.
    k5 = jax.random.PRNGKey(4)
    x5 = jax.random.randint(k5, (2, 1, 8, 16), minval=0, maxval=80, dtype=jnp.int32)
    out5 = jax.block_until_ready(one_hot_pallas(x5, 80, vmem_budget_bytes=64 << 10))
    ref5 = _reference(x5, 80)
    assert out5.shape == (2, 80, 8, 16), out5.shape
    np.testing.assert_allclose(np.asarray(out5), np.asarray(ref5), atol=0, rtol=0)

    print("KERNEL_OK")
</pallas_src>

<mosaic_0001>
module attributes {stable_mosaic.version = 11 : i64} {
  func.func @_one_hot_nd_kernel(%arg0: i32, %arg1: i32, %arg2: i32, %arg3: memref<1x1x256xi32, #tpu.memory_space<vmem>>, %arg4: memref<1x4x256xf32, #tpu.memory_space<vmem>>) attributes {dimension_semantics = [#tpu.dimension_semantics<parallel>, #tpu.dimension_semantics<parallel>, #tpu.dimension_semantics<parallel>], iteration_bounds = array<i64: 2, 1, 1>, scalar_prefetch = 0 : i64, scratch_operands = 0 : i64, tpu.core_type = #tpu.core_type<tc>, window_params = [{transform_indices = @transform_0, window_bounds = array<i64: 1, 1, 256>}, {transform_indices = @transform_1, window_bounds = array<i64: 1, 4, 256>}]} {
    %c0 = arith.constant 0 : index
    %c0_0 = arith.constant 0 : index
    %c0_1 = arith.constant 0 : index
    %0 = vector.load %arg3[%c0, %c0_0, %c0_1] : memref<1x1x256xi32, #tpu.memory_space<vmem>>, vector<1x1x256xi32>
    %c4_i32 = arith.constant 4 : i32
    %1 = arith.muli %arg1, %c4_i32 : i32
    %2 = tpu.iota {dimensions = array<i32: 1>} : vector<1x4x256xi32>
    %3 = vector.broadcast %1 : i32 to vector<1x4x256xi32>
    %4 = arith.addi %3, %2 : vector<1x4x256xi32>
    %5 = vector.broadcast %0 : vector<1x1x256xi32> to vector<1x4x256xi32>
    %6 = arith.cmpi eq, %5, %4 : vector<1x4x256xi32>
    %7 = arith.extui %6 : vector<1x4x256xi1> to vector<1x4x256xi32>
    %8 = arith.sitofp %7 : vector<1x4x256xi32> to vector<1x4x256xf32>
    %c0_2 = arith.constant 0 : index
    %c0_3 = arith.constant 0 : index
    %c0_4 = arith.constant 0 : index
    %9 = vector.load %arg4[%c0_2, %c0_3, %c0_4] : memref<1x4x256xf32, #tpu.memory_space<vmem>>, vector<1x4x256xf32>
    tpu.vector_store %arg4[%c0_2, %c0_3, %c0_4], %8 {strides = array<i32>} : memref<1x4x256xf32, #tpu.memory_space<vmem>>, vector<1x4x256xf32>,
    return
  }
  func.func @transform_0(%arg0: i32, %arg1: i32, %arg2: i32) -> (i32, i32, i32) {
    %c0_i32 = arith.constant 0 : i32
    %c0_i32_0 = arith.constant 0 : i32
    return %arg0, %c0_i32, %arg2 : i32, i32, i32
  }
  func.func @transform_1(%arg0: i32, %arg1: i32, %arg2: i32) -> (i32, i32, i32) {
    %c0_i32 = arith.constant 0 : i32
    return %arg0, %arg1, %arg2 : i32, i32, i32
  }
}

</mosaic_0001>

<llo_original>
// kernel: tpu_custom_call.1
$region0: #{tpu_custom_call.1}
  #allocation0 [shape = 'u32[]', space=smem, size = 0x4, offset = 0x4, fixed_abs, tag = 'smem constant byte address 0x4 - core index']
  #allocation1 [shape = 'u32[144,128]{1,0:T(1,128)}', space=vmem, size = 0x12000, scoped, tag = 'internal scratch']
  %s0 = inlined_call_operand.hbm [shape: s32[2,1,256], index: 0, kind: input, shape index: {}]
  %s1 = inlined_call_operand.hbm [shape: f32[2,4,256], index: 1, kind: output, shape index: {}]
  %s2 = sld [smem:[#allocation0]]
  $region41: #{tpu_custom_call.1} parent=0
    _
  %s4 = ssub.s32 1, %s2
  %s5 = scalar_select 0, %s4, %s2
  $region1: #{tpu_custom_call.1} parent=0
    #allocation2 [shape = 'u8[2048]{0}', space=vmem, size = 0x800, scoped, tag = 'input window, operand 0']
    #allocation3 [shape = 's32[2]{0}', space=sflag, size = 0x8, scoped, tag = 'scoped memory for tpu_custom_call.1']
    #allocation4 [shape = 's32[2]{0}', space=sflag, size = 0x8, scoped, tag = 'scoped memory for tpu_custom_call.1']
    #allocation5 [shape = 'u8[8192]{0}', space=vmem, size = 0x2000, scoped, tag = 'output window, operand 0']
    %6 = vsyncpa [#allocation3], 0
    %s7 = scalar_lea.sflag [#allocation3], 1
    %8 = vsyncpa %s7, 0
    %9 = vsyncpa [#allocation4], 0
    %s10 = scalar_lea.sflag [#allocation4], 1
    %11 = vsyncpa %s10, 0
    loop: start=0, step=1, limit=4
    $region2: #{tpu_custom_call.1} parent=1 // loop_pre_header
      _
    $region3: #{tpu_custom_call.1} parent=1 // loop_header
      %s13 = sphi 0, %s17
      %p14 = scmp.ge.s32.totalorder %s13, 4
      %s20 = sphi 0, %s39
      %s21 = sphi 0, %s35
      %s22 = sphi 0, %s31
      %s23 = sphi 0, %s20
      %s24 = sphi 0, %s21
      %s25 = sphi 0, %s22
      %s26 = sphi 0, %s23
      %s27 = sphi 0, %s24
      %s28 = sphi 0, %s25
      %s44 = sphi 0, %s46
      %s47 = sphi 0, %s44
      %s48 = sphi 0, %s47
      %s64 = sphi 0, %s48
      %s74 = sphi 0, %s76
      %s77 = sphi 0, %s74
      %s78 = sphi 0, %s77
      %s94 = sphi 0, %s78
    $region4: #{tpu_custom_call.1} parent=1 // loop_header_branch
      %16 = sbr.rel (%p14) target = $region8
    $region5: #{tpu_custom_call.1} parent=1 // loop_body
      %s18 = ssub.s32 %s13, 1
      %s19 = ssub.s32 %s13, 2
      %s29 = sadd.s32 1, %s22
      %p30 = scmp.ge.s32.totalorder %s29, 1
      %s31 = scalar_select %p30, 0, %s29
      %s32 = sadd.s32 1, %s21
      %s33 = scalar_select %p30, %s32, %s21
      %p34 = scmp.ge.s32.totalorder %s33, 1
      %s35 = scalar_select %p34, 0, %s33
      %s36 = sadd.s32 1, %s20
      %s37 = scalar_select %p34, %s36, %s20
      %p38 = scmp.ge.s32.totalorder %s37, 2
      %s39 = scalar_select %p38, 0, %s37
      %s40 = ssub.s32 %s20, %s39
      %s41 = ssub.s32 %s22, %s31
      %s42 = sor.u32 %s40, %s41
      %p43 = scmp.eq.s32.totalorder %s42, 0
      %s45 = sadd.s32 %s44, 1
      %s46 = scalar_select %p43, %s44, %s45
      %p49 = pneg %p43
      %p50 = scmp.eq.s32.totalorder %s13, 1
      %p51 = por %p49, %p50
      %p52 = scmp.ne.s32.totalorder %s44, %s47
      %p53 = scmp.eq.s32.totalorder %s13, 0
      %p54 = por %p52, %p53
      %p55 = scmp.ne.s32.totalorder %s44, %s47
      %p56 = scmp.eq.s32.totalorder %s18, 1
      %p57 = por %p55, %p56
      %p58 = scmp.ne.s32.totalorder %s47, %s48
      %p59 = scmp.eq.s32.totalorder %s18, 0
      %p60 = por %p58, %p59
      %p61 = scmp.ne.s32.totalorder %s47, %s48
      %p62 = scmp.eq.s32.totalorder %s19, 1
      %p63 = por %p61, %p62
      %p65 = scmp.ne.s32.totalorder %s48, %s64
      %p66 = scmp.eq.s32.totalorder %s19, 0
      %p67 = por %p65, %p66
      %s68 = ssub.s32 %s20, %s39
      %s69 = ssub.s32 %s21, %s35
      %s70 = sor.u32 %s68, %s69
      %s71 = ssub.s32 %s22, %s31
      %s72 = sor.u32 %s70, %s71
      %p73 = scmp.eq.s32.totalorder %s72, 0
      %s75 = sadd.s32 %s74, 1
      %s76 = scalar_select %p73, %s74, %s75
      %p79 = pneg %p73
      %p80 = scmp.eq.s32.totalorder %s13, 1
      %p81 = por %p79, %p80
      %p82 = scmp.ne.s32.totalorder %s74, %s77
      %p83 = scmp.eq.s32.totalorder %s13, 0
      %p84 = por %p82, %p83
      %p85 = scmp.ne.s32.totalorder %s74, %s77
      %p86 = scmp.eq.s32.totalorder %s18, 1
      %p87 = por %p85, %p86
      %p88 = scmp.ne.s32.totalorder %s77, %s78
      %p89 = scmp.eq.s32.totalorder %s18, 0
      %p90 = por %p88, %p89
      %p91 = scmp.ne.s32.totalorder %s77, %s78
      %p92 = scmp.eq.s32.totalorder %s19, 1
      %p93 = por %p91, %p92
      %p95 = scmp.ne.s32.totalorder %s78, %s94
      %p96 = scmp.eq.s32.totalorder %s19, 0
      %p97 = por %p95, %p96
      %p98 = scmp.le.s32.totalorder 1, %s13
      %p99 = scmp.lt.s32.totalorder %s13, 3
      %p100 = pnand %p98, %p99
      %p101 = pneg %p100
      // Predicated region
      $region9: #{tpu_custom_call.1} parent=5 // pred_check
        _
      $region10: #{tpu_custom_call.1} parent=5 // pred_check_branch
        %103 = sbr.rel (%p100) target = $region12
      $region11: #{tpu_custom_call.1} parent=5 // pred_region
        %s104 = ssub.s32 %s13, 1
      $region12: #{tpu_custom_call.1} parent=5 // pred_fallthru
        _
      %p105 = scmp.lt.s32.totalorder %s13, 2
      // Predicated region
      $region13: #{tpu_custom_call.1} parent=5 // pred_check
        %p106 = pneg %p105
      $region14: #{tpu_custom_call.1} parent=5 // pred_check_branch
        %108 = sbr.rel (%p106) target = $region16
      $region15: #{tpu_custom_call.1} parent=5 // pred_region
        // Predicated region
        $region17: #{tpu_custom_call.1} parent=15 // pred_check
          %p109 = pneg %p54
        $region18: #{tpu_custom_call.1} parent=15 // pred_check_branch
          %111 = sbr.rel (%p109) target = $region20
        $region19: #{tpu_custom_call.1} parent=15 // pred_region
          %s112 = sand.u32 %s44, 1
          %s113 = scalar_lea.sflag [#allocation3], %s112
          %s114 = sand.u32 %s44, 1
          %s115 = smul.addr %s114, 2
          %s116 = scalar_lea.vmem [#allocation2], %s115
          %s117 = smul.u32 2, %s22
          %s119 = ssub.s32 32, 32
          %120 = vsyncadd %s113, %s119
          %s121 = smul.addr %s20, 2
          %s122 = sadd.s32 %s117, %s121
          %s123 = smul.addr %s122, 16
          %s124 = scalar_lea.hbm %s0, %s123
          %s126 = sshll.u32 %s116, 4
          %s127 = int_to_ptr.vmem [resolvable:$true] %s126
          %129 = dma.hbm_to_vmem [thread:$0]  %s124, 32, %s127, %s113
        $region20: #{tpu_custom_call.1} parent=15 // pred_fallthru
          _
      $region16: #{tpu_custom_call.1} parent=5 // pred_fallthru
        _
      %p130 = scmp.le.s32.totalorder 1, %s13
      %p131 = scmp.lt.s32.totalorder %s13, 3
      %p132 = pnand %p130, %p131
      %p133 = pneg %p132
      // Predicated region
      $region21: #{tpu_custom_call.1} parent=5 // pred_check
        _
      $region22: #{tpu_custom_call.1} parent=5 // pred_check_branch
        %135 = sbr.rel (%p132) target = $region24
      $region23: #{tpu_custom_call.1} parent=5 // pred_region
        %s136 = ssub.s32 %s13, 1
        %s137 = sand.u32 %s47, 1
        %s138 = scalar_lea.sflag [#allocation3], %s137
        %s139 = sand.u32 %s47, 1
        %s140 = smul.addr %s139, 2
        %s141 = scalar_lea.vmem [#allocation2], %s140
        // Predicated region
        $region25: #{tpu_custom_call.1} parent=23 // pred_check
          %p142 = pneg %p60
        $region26: #{tpu_custom_call.1} parent=23 // pred_check_branch
          %144 = sbr.rel (%p142) target = $region28
        $region27: #{tpu_custom_call.1} parent=23 // pred_region
          %145 = dma.done %s138, 32
        $region28: #{tpu_custom_call.1} parent=23 // pred_fallthru
          _
        %s146 = sand.u32 %s47, 1
        %s147 = scalar_lea.sflag [#allocation3], %s146
        %s148 = sand.u32 %s47, 1
        %s149 = smul.addr %s148, 2
        %s150 = scalar_lea.vmem [#allocation2], %s149
        %p151 = pneg %p60
        %p152 = pneg %p57
        %p153 = pneg %p90
        %p154 = pneg %p87
        %s155 = sand.u32 %s77, 1
        %s156 = scalar_lea.sflag [#allocation4], %s155
        %s157 = sand.u32 %s77, 1
        %s158 = smul.addr %s157, 8
        %s159 = scalar_lea.vmem [#allocation5], %s158
        %s160 = smul.u32 2, %s25
        %s161 = smul.u32 2, %s25
        %v162 = vld [vmem:[%s141] sm:$0x3]
        %s163 = smul.u32 %s24, 4
        %v164 = vlaneseq
        %v165 = vshrl.u32 %v164, 7
        %v166 = vstv %s163
        %v167 = vadd.s32 %v166, %v165
        %v168 = vlaneseq
        %v169 = vshrl.u32 %v168, 7
        %v170 = vsub.s32 0, %v169
        %v171 = vrot.slane %v162, %v170
        %v172 = vlaneseq
        %v173 = vshrl.u32 %v172, 7
        %v174 = vsub.s32 1, %v173
        %v175 = vrot.slane %v162, %v174
        %vm176 = vcmp.eq.s32.totalorder %v171, %v167
        %vm177 = vcmp.eq.s32.totalorder %v175, %v167
        %v178 = vsel %vm176, 1, 0
        %v179 = vsel %vm177, 1, 0
        %v180 = vcvt.s32.f32 %v178
        %v181 = vcvt.s32.f32 %v179
        %v184 = vcombine.low %v180, %v181
        %186 = vst [vmem:[%s159] sm:$0xff] %v184
        %s187 = sand.u32 %s77, 1
        %s188 = scalar_lea.sflag [#allocation4], %s187
        %s189 = sand.u32 %s77, 1
        %s190 = smul.addr %s189, 8
        %s191 = scalar_lea.vmem [#allocation5], %s190
        // Predicated region
        $region29: #{tpu_custom_call.1} parent=23 // pred_check
          %p192 = pneg %p87
        $region30: #{tpu_custom_call.1} parent=23 // pred_check_branch
          %194 = sbr.rel (%p192) target = $region32
        $region31: #{tpu_custom_call.1} parent=23 // pred_region
          %s195 = smul.u32 2, %s25
          %s197 = ssub.s32 128, 128
          %198 = vsyncadd %s188, %s197
          %s199 = smul.addr %s24, 2
          %s200 = sadd.s32 %s195, %s199
          %s201 = smul.addr %s23, 2
          %s202 = sadd.s32 %s200, %s201
          %s203 = smul.addr %s202, 64
          %s204 = scalar_lea.hbm %s1, %s203
          %s206 = sshll.u32 %s191, 4
          %s207 = int_to_ptr.vmem [resolvable:$true] %s206
          %209 = dma.vmem_to_hbm [thread:$0]  %s207, 128, %s204, %s188
        $region32: #{tpu_custom_call.1} parent=23 // pred_fallthru
          _
      $region24: #{tpu_custom_call.1} parent=5 // pred_fallthru
        _
      %p210 = scmp.le.s32.totalorder 2, %s13
      // Predicated region
      $region33: #{tpu_custom_call.1} parent=5 // pred_check
        %p211 = pneg %p210
      $region34: #{tpu_custom_call.1} parent=5 // pred_check_branch
        %213 = sbr.rel (%p211) target = $region36
      $region35: #{tpu_custom_call.1} parent=5 // pred_region
        %s214 = ssub.s32 %s13, 2
        // Predicated region
        $region37: #{tpu_custom_call.1} parent=35 // pred_check
          %p215 = pneg %p93
        $region38: #{tpu_custom_call.1} parent=35 // pred_check_branch
          %217 = sbr.rel (%p215) target = $region40
        $region39: #{tpu_custom_call.1} parent=35 // pred_region
          %s218 = sand.u32 %s78, 1
          %s219 = scalar_lea.sflag [#allocation4], %s218
          %s220 = sand.u32 %s78, 1
          %s221 = smul.addr %s220, 8
          %s222 = scalar_lea.vmem [#allocation5], %s221
          %223 = dma.done %s219, 128
        $region40: #{tpu_custom_call.1} parent=35 // pred_fallthru
          _
      $region36: #{tpu_custom_call.1} parent=5 // pred_fallthru
        _
    $region6: #{tpu_custom_call.1} parent=1 // loop_footer
      %s17 = sadd.s32 1, %s13
    $region7: #{tpu_custom_call.1} parent=1 // loop_footer_branch
      %12 = sbr.rel target = $region3
    $region8: #{tpu_custom_call.1} parent=1 // loop_exit
      _
    %224 = vsyncpa [#allocation3], 1
    %s225 = scalar_lea.sflag [#allocation3], 1
    %226 = vsyncpa %s225, 1
    %227 = vsyncpa [#allocation4], 1
    %s228 = scalar_lea.sflag [#allocation4], 1
    %229 = vsyncpa %s228, 1

</llo_original>
